<compile_context>
chip_gen: v7x
topology: tpu7x:2x2x1
jax: 0.10.0
libtpu: 0.0.40
codegen_flags: <defaults>
</compile_context>

<pallas_src>
import functools

import jax
import jax.numpy as jnp
from jax.experimental import pallas as pl
from jax.experimental.pallas import tpu as pltpu


def _round_up(x: int, m: int) -> int:
    return (x + m - 1) // m * m


def _pick_tile_h(H: int, W: int, cin: int, cout: int, in_bytes: int,
                 budget_bytes: int = 18 * 1024 * 1024) -> int:
    """Largest even divisor TH of H whose per-step live VMEM fits the budget."""
    best = 2
    for th in range(2, H + 1, 2):
        if H % th:
            continue
        hw = th * W
        phw = (th // 2) * (W // 2)
        est = (
            2 * hw * cin * in_bytes        # double-buffered input block
            + hw * cin * 4                 # post-BN/ReLU f32 intermediate
            + hw * cin * 4                 # pooling temporaries (upper bound)
            + phw * cin * (4 + 2)          # pooled f32 + bf16 copy feeding the MXU
            + phw * cout * 4               # matmul result (f32)
            + 2 * phw * cout * 4           # double-buffered output block
            + 2 * (cin * cout * 2 + 2 * cin * 4)  # weight (bf16) + scale/bias
        )
        if est <= budget_bytes:
            best = th
    return best


def _transition_kernel(x_ref, scale_ref, bias_ref, w_ref, o_ref):
    # x_ref:     (1, TH, W, Cin)   one H-tile of one image (NHWC)
    # scale_ref: (1, Cin)  f32     gamma / sqrt(var + eps)
    # bias_ref:  (1, Cin)  f32     beta - mean * scale
    # w_ref:     (Cin, Cout) bf16  1x1 conv weight, pre-transposed & pre-cast
    # o_ref:     (1, TH//2, W//2, Cout)
    x = x_ref[0].astype(jnp.float32)                 # (TH, W, Cin)
    th, w_sp, cin = x.shape

    # Folded BatchNorm + ReLU (channels on the lane axis -> plain VPU ops).
    y = jnp.maximum(x * scale_ref[...] + bias_ref[...], 0.0)

    # 2x2 average pool BEFORE the 1x1 conv (linearity => exact).
    # H-pool: the split reshape keeps the (W, Cin) tile layout intact.
    yh = y.reshape(th // 2, 2, w_sp, cin).sum(axis=1)          # (TH//2, W, Cin)
    # W-pool along the sublane axis.
    yw = yh.reshape(th // 2, w_sp // 2, 2, cin).sum(axis=2)    # (TH//2, W//2, Cin)
    pooled = yw * 0.25

    # 1x1 conv == channel matmul on the MXU; bf16 operands, f32 accumulation.
    pm = pooled.reshape((th // 2) * (w_sp // 2), cin).astype(w_ref.dtype)
    z = jnp.dot(pm, w_ref[...], preferred_element_type=jnp.float32)

    o_ref[0] = z.reshape(th // 2, w_sp // 2, -1).astype(o_ref.dtype)


def transition_forward_nhwc(x_nhwc, scale, bias, w, *, out_dtype=None):
    """Fused eval-BN + ReLU + 1x1 conv + 2x2/2 avg-pool, NHWC in / NHWC out.

    x_nhwc: (N, H, W, Cin); scale/bias: folded BN params (Cin,); w: (Cin, Cout).
    Returns (N, H//2, W//2, Cout).
    """
    N, H, W, Cin = x_nhwc.shape
    Cout = w.shape[1]
    assert H % 2 == 0 and W % 2 == 0, "even spatial dims required"
    if out_dtype is None:
        out_dtype = x_nhwc.dtype

    # Lane-dense padding (no-op when Cin/Cout already multiples of 128).
    Cin_p, Cout_p = _round_up(Cin, 128), _round_up(Cout, 128)
    if Cin_p != Cin:
        x_nhwc = jnp.pad(x_nhwc, ((0, 0), (0, 0), (0, 0), (0, Cin_p - Cin)))
        scale = jnp.pad(scale, (0, Cin_p - Cin))
        bias = jnp.pad(bias, (0, Cin_p - Cin))
        w = jnp.pad(w, ((0, Cin_p - Cin), (0, 0)))
    if Cout_p != Cout:
        w = jnp.pad(w, ((0, 0), (0, Cout_p - Cout)))

    scale2 = scale.reshape(1, Cin_p).astype(jnp.float32)
    bias2 = bias.reshape(1, Cin_p).astype(jnp.float32)
    w_bf16 = w.astype(jnp.bfloat16)     # cast once; MXU runs bf16 at full rate

    TH = _pick_tile_h(H, W, Cin_p, Cout_p, jnp.dtype(x_nhwc.dtype).itemsize)
    Hp, Wp = H // 2, W // 2

    out = pl.pallas_call(
        _transition_kernel,
        out_shape=jax.ShapeDtypeStruct((N, Hp, Wp, Cout_p), out_dtype),
        grid_spec=pltpu.PrefetchScalarGridSpec(
            num_scalar_prefetch=0,
            grid=(N, H // TH),
            in_specs=[
                pl.BlockSpec((1, TH, W, Cin_p), lambda n, h: (n, h, 0, 0)),
                pl.BlockSpec((1, Cin_p), lambda n, h: (0, 0)),
                pl.BlockSpec((1, Cin_p), lambda n, h: (0, 0)),
                pl.BlockSpec((Cin_p, Cout_p), lambda n, h: (0, 0)),
            ],
            out_specs=pl.BlockSpec((1, TH // 2, Wp, Cout_p),
                                   lambda n, h: (n, h, 0, 0)),
        ),
        compiler_params=pltpu.CompilerParams(
            dimension_semantics=("parallel", "parallel"),
            vmem_limit_bytes=40 * 1024 * 1024,
        ),
    )(x_nhwc, scale2, bias2, w_bf16)

    if Cout_p != Cout:
        out = out[..., :Cout]
    return out


@functools.partial(jax.jit, static_argnames=())
def transition_forward(x_nchw, gamma, beta, running_mean, running_var, conv_w,
                       eps=1e-5):
    """PyTorch-layout wrapper: x (N, Cin, H, W), conv_w (Cout, Cin, 1, 1)
    -> (N, Cout, H//2, W//2).  NOTE: the two transposes below each cost a full
    HBM read+write; in an end-to-end NHWC network call transition_forward_nhwc
    directly and skip them."""
    N, Cin, H, W = x_nchw.shape
    Cout = conv_w.shape[0]

    inv_std = 1.0 / jnp.sqrt(running_var.astype(jnp.float32) + eps)
    scale = gamma.astype(jnp.float32) * inv_std
    bias = beta.astype(jnp.float32) - running_mean.astype(jnp.float32) * scale
    w = conv_w.reshape(Cout, Cin).T                       # (Cin, Cout)

    x_nhwc = jnp.transpose(x_nchw, (0, 2, 3, 1))          # (N, H, W, Cin)
    out_nhwc = transition_forward_nhwc(x_nhwc, scale, bias, w)
    return jnp.transpose(out_nhwc, (0, 3, 1, 2))          # (N, Cout, H//2, W//2)


if __name__ == "__main__":
    key = jax.random.PRNGKey(0)
    k_x, k_g, k_b, k_m, k_v, k_w = jax.random.split(key, 6)

    N, Cin, H, W = 2, 8, 16, 16
    Cout = Cin // 2  # DenseNet transition halves channels

    x = jax.random.normal(k_x, (N, Cin, H, W), dtype=jnp.float32)
    gamma = jax.random.normal(k_g, (Cin,), dtype=jnp.float32) * 0.1 + 1.0
    beta = jax.random.normal(k_b, (Cin,), dtype=jnp.float32) * 0.1
    running_mean = jax.random.normal(k_m, (Cin,), dtype=jnp.float32) * 0.1
    running_var = jax.nn.softplus(jax.random.normal(k_v, (Cin,), dtype=jnp.float32)) + 0.5
    conv_w = jax.random.normal(k_w, (Cout, Cin, 1, 1), dtype=jnp.float32) * 0.2

    out = transition_forward(x, gamma, beta, running_mean, running_var, conv_w)
    out = jax.block_until_ready(out)

    # sanity check against a pure-JAX (f32) reference with PyTorch semantics
    eps = 1e-5
    xn = (x - running_mean[None, :, None, None]) / jnp.sqrt(running_var + eps)[None, :, None, None]
    xn = xn * gamma[None, :, None, None] + beta[None, :, None, None]
    xr = jnp.maximum(xn, 0.0)
    conv = jnp.einsum("nchw,oc->nohw", xr, conv_w.reshape(Cout, Cin))
    ref = conv.reshape(N, Cout, H // 2, 2, W // 2, 2).mean(axis=(3, 5))

    assert out.shape == (N, Cout, H // 2, W // 2)
    max_err = float(jnp.max(jnp.abs(out - ref)))
    # bf16 MXU operands (f32 accumulation) -> allow a small numerical slack.
    assert jnp.allclose(out, ref, atol=2e-2, rtol=2e-2), max_err

    print("KERNEL_OK")
</pallas_src>

<mosaic_0001>
module attributes {stable_mosaic.version = 11 : i64} {
  func.func @_transition_kernel(%arg0: i32, %arg1: i32, %arg2: memref<1x16x16x128xf32, #tpu.memory_space<vmem>>, %arg3: memref<1x128xf32, #tpu.memory_space<vmem>>, %arg4: memref<1x128xf32, #tpu.memory_space<vmem>>, %arg5: memref<128x128xbf16, #tpu.memory_space<vmem>>, %arg6: memref<1x8x8x128xf32, #tpu.memory_space<vmem>>) attributes {dimension_semantics = [#tpu.dimension_semantics<parallel>, #tpu.dimension_semantics<parallel>], iteration_bounds = array<i64: 2, 1>, scalar_prefetch = 0 : i64, scratch_operands = 0 : i64, tpu.core_type = #tpu.core_type<tc>, window_params = [{transform_indices = @transform_0, window_bounds = array<i64: 1, 16, 16, 128>}, {pipeline_mode = #tpu.pipeline_mode<synchronous>, transform_indices = @transform_1, window_bounds = array<i64: 1, 128>}, {pipeline_mode = #tpu.pipeline_mode<synchronous>, transform_indices = @transform_2, window_bounds = array<i64: 1, 128>}, {pipeline_mode = #tpu.pipeline_mode<synchronous>, transform_indices = @transform_3, window_bounds = array<i64: 128, 128>}, {transform_indices = @transform_4, window_bounds = array<i64: 1, 8, 8, 128>}]} {
    %c0 = arith.constant 0 : index
    %c0_0 = arith.constant 0 : index
    %c0_1 = arith.constant 0 : index
    %c0_2 = arith.constant 0 : index
    %0 = vector.load %arg2[%c0, %c0_0, %c0_1, %c0_2] : memref<1x16x16x128xf32, #tpu.memory_space<vmem>>, vector<1x16x16x128xf32>
    %1 = vector.shape_cast %0 : vector<1x16x16x128xf32> to vector<16x16x128xf32>
    %c0_3 = arith.constant 0 : index
    %c0_4 = arith.constant 0 : index
    %2 = vector.load %arg3[%c0_3, %c0_4] : memref<1x128xf32, #tpu.memory_space<vmem>>, vector<1x128xf32>
    %3 = vector.shape_cast %2 : vector<1x128xf32> to vector<1x1x128xf32>
    %4 = vector.broadcast %3 : vector<1x1x128xf32> to vector<16x16x128xf32>
    %5 = arith.mulf %1, %4 : vector<16x16x128xf32>
    %c0_5 = arith.constant 0 : index
    %c0_6 = arith.constant 0 : index
    %6 = vector.load %arg4[%c0_5, %c0_6] : memref<1x128xf32, #tpu.memory_space<vmem>>, vector<1x128xf32>
    %7 = vector.shape_cast %6 : vector<1x128xf32> to vector<1x1x128xf32>
    %8 = vector.broadcast %7 : vector<1x1x128xf32> to vector<16x16x128xf32>
    %9 = arith.addf %5, %8 : vector<16x16x128xf32>
    %cst = arith.constant 0.000000e+00 : f32
    %10 = vector.broadcast %cst : f32 to vector<16x16x128xf32>
    %11 = arith.maximumf %9, %10 : vector<16x16x128xf32>
    %12 = vector.shape_cast %11 : vector<16x16x128xf32> to vector<8x2x16x128xf32>
    %cst_7 = arith.constant dense<0.000000e+00> : vector<8x16x128xf32>
    %13 = vector.multi_reduction <add>, %12, %cst_7 [1] : vector<8x2x16x128xf32> to vector<8x16x128xf32>
    %14 = vector.shape_cast %13 : vector<8x16x128xf32> to vector<8x8x2x128xf32>
    %cst_8 = arith.constant dense<0.000000e+00> : vector<8x8x128xf32>
    %15 = vector.multi_reduction <add>, %14, %cst_8 [2] : vector<8x8x2x128xf32> to vector<8x8x128xf32>
    %cst_9 = arith.constant 2.500000e-01 : f32
    %16 = vector.broadcast %cst_9 : f32 to vector<8x8x128xf32>
    %17 = arith.mulf %15, %16 : vector<8x8x128xf32>
    %18 = vector.shape_cast %17 : vector<8x8x128xf32> to vector<64x128xf32>
    %19 = arith.truncf %18 : vector<64x128xf32> to vector<64x128xbf16>
    %c0_10 = arith.constant 0 : index
    %c0_11 = arith.constant 0 : index
    %20 = vector.load %arg5[%c0_10, %c0_11] : memref<128x128xbf16, #tpu.memory_space<vmem>>, vector<128x128xbf16>
    %cst_12 = arith.constant dense<0.000000e+00> : vector<64x128xf32>
    %21 = tpu.matmul %19, %20, %cst_12 {dimension_numbers = #tpu.dot_dimension_numbers<[1], [0], [0], [1], [0, 0, 1, 1], [], []>} : vector<64x128xbf16>, vector<128x128xbf16>, vector<64x128xf32> -> vector<64x128xf32>
    %22 = vector.shape_cast %21 : vector<64x128xf32> to vector<8x8x128xf32>
    %c0_13 = arith.constant 0 : index
    %c0_14 = arith.constant 0 : index
    %c0_15 = arith.constant 0 : index
    %c0_16 = arith.constant 0 : index
    %23 = vector.load %arg6[%c0_13, %c0_14, %c0_15, %c0_16] : memref<1x8x8x128xf32, #tpu.memory_space<vmem>>, vector<1x8x8x128xf32>
    %24 = vector.shape_cast %23 : vector<1x8x8x128xf32> to vector<8x8x128xf32>
    %25 = vector.shape_cast %22 : vector<8x8x128xf32> to vector<1x8x8x128xf32>
    tpu.vector_store %arg6[%c0_13, %c0_14, %c0_15, %c0_16], %25 {strides = array<i32>} : memref<1x8x8x128xf32, #tpu.memory_space<vmem>>, vector<1x8x8x128xf32>,
    return
  }
  func.func @transform_0(%arg0: i32, %arg1: i32) -> (i32, i32, i32, i32) {
    %c0_i32 = arith.constant 0 : i32
    %c0_i32_0 = arith.constant 0 : i32
    %c0_i32_1 = arith.constant 0 : i32
    return %arg0, %arg1, %c0_i32, %c0_i32_0 : i32, i32, i32, i32
  }
  func.func @transform_1(%arg0: i32, %arg1: i32) -> (i32, i32) {
    %c0_i32 = arith.constant 0 : i32
    %c0_i32_0 = arith.constant 0 : i32
    %c0_i32_1 = arith.constant 0 : i32
    return %c0_i32, %c0_i32_0 : i32, i32
  }
  func.func @transform_2(%arg0: i32, %arg1: i32) -> (i32, i32) {
    %c0_i32 = arith.constant 0 : i32
    %c0_i32_0 = arith.constant 0 : i32
    %c0_i32_1 = arith.constant 0 : i32
    return %c0_i32, %c0_i32_0 : i32, i32
  }
  func.func @transform_3(%arg0: i32, %arg1: i32) -> (i32, i32) {
    %c0_i32 = arith.constant 0 : i32
    %c0_i32_0 = arith.constant 0 : i32
    %c0_i32_1 = arith.constant 0 : i32
    return %c0_i32, %c0_i32_0 : i32, i32
  }
  func.func @transform_4(%arg0: i32, %arg1: i32) -> (i32, i32, i32, i32) {
    %c0_i32 = arith.constant 0 : i32
    %c0_i32_0 = arith.constant 0 : i32
    %c0_i32_1 = arith.constant 0 : i32
    return %arg0, %arg1, %c0_i32, %c0_i32_0 : i32, i32, i32, i32
  }
}

</mosaic_0001>

<llo_original>
// kernel: transition_forward.1
$region0: #{transition_forward.1}
  #allocation0 [shape = 'u32[]', space=smem, size = 0x4, offset = 0x4, fixed_abs, tag = 'smem constant byte address 0x4 - core index']
  #allocation1 [shape = 'u32[144,128]{1,0:T(1,128)}', space=vmem, size = 0x12000, scoped, tag = 'internal scratch']
  %s0 = inlined_call_operand.vmem [shape: f32[2,16,16,128], index: 0, kind: input, shape index: {}]
  %s1 = inlined_call_operand.vmem [shape: f32[1,128], index: 1, kind: input, shape index: {}]
  %s2 = inlined_call_operand.vmem [shape: f32[1,128], index: 2, kind: input, shape index: {}]
  %s3 = inlined_call_operand.vmem [shape: bf16[128,128], index: 3, kind: input, shape index: {}]
  %s4 = inlined_call_operand.vmem [shape: f32[2,8,8,128], index: 4, kind: output, shape index: {}]
  %s5 = sld [smem:[#allocation0]]
  $region49: #{transition_forward.1} parent=0
    _
  %s7 = ssub.s32 1, %s5
  %s8 = scalar_select 0, %s7, %s5
  loop: start=0, step=1, limit=4
  $region2: #{transition_forward.1} parent=0 // loop_pre_header
    _
  $region3: #{transition_forward.1} parent=0 // loop_header
    %s10 = sphi 0, %s14
    %p11 = scmp.ge.s32.totalorder %s10, 4
    %s17 = sphi 0, %s29
    %s18 = sphi 0, %s25
    %s19 = sphi 0, %s17
    %s20 = sphi 0, %s18
    %s21 = sphi 0, %s19
    %s22 = sphi 0, %s20
    %s34 = sphi 0, %s36
    %s37 = sphi 0, %s34
    %s38 = sphi 0, %s37
    %s54 = sphi 0, %s38
    %s58 = sphi 0, %s58
    %s60 = sphi 0, %s58
    %s61 = sphi 0, %s60
    %s75 = sphi 0, %s61
    %s79 = sphi 0, %s79
    %s81 = sphi 0, %s79
    %s82 = sphi 0, %s81
    %s96 = sphi 0, %s82
    %s100 = sphi 0, %s100
    %s102 = sphi 0, %s100
    %s103 = sphi 0, %s102
    %s117 = sphi 0, %s103
    %s125 = sphi 0, %s127
    %s128 = sphi 0, %s125
    %s129 = sphi 0, %s128
    %s145 = sphi 0, %s129
  $region4: #{transition_forward.1} parent=0 // loop_header_branch
    %13 = sbr.rel (%p11) target = $region8
  $region5: #{transition_forward.1} parent=0 // loop_body
    %s15 = ssub.s32 %s10, 1
    %s16 = ssub.s32 %s10, 2
    %s23 = sadd.s32 1, %s18
    %p24 = scmp.ge.s32.totalorder %s23, 1
    %s25 = scalar_select %p24, 0, %s23
    %s26 = sadd.s32 1, %s17
    %s27 = scalar_select %p24, %s26, %s17
    %p28 = scmp.ge.s32.totalorder %s27, 2
    %s29 = scalar_select %p28, 0, %s27
    %s30 = ssub.s32 %s17, %s29
    %s31 = ssub.s32 %s18, %s25
    %s32 = sor.u32 %s30, %s31
    %p33 = scmp.eq.s32.totalorder %s32, 0
    %s35 = sadd.s32 %s34, 1
    %s36 = scalar_select %p33, %s34, %s35
    %p39 = pneg %p33
    %p40 = scmp.eq.s32.totalorder %s10, 1
    %p41 = por %p39, %p40
    %p42 = scmp.ne.s32.totalorder %s34, %s37
    %p43 = scmp.eq.s32.totalorder %s10, 0
    %p44 = por %p42, %p43
    %p45 = scmp.ne.s32.totalorder %s34, %s37
    %p46 = scmp.eq.s32.totalorder %s15, 1
    %p47 = por %p45, %p46
    %p48 = scmp.ne.s32.totalorder %s37, %s38
    %p49 = scmp.eq.s32.totalorder %s15, 0
    %p50 = por %p48, %p49
    %p51 = scmp.ne.s32.totalorder %s37, %s38
    %p52 = scmp.eq.s32.totalorder %s16, 1
    %p53 = por %p51, %p52
    %p55 = scmp.ne.s32.totalorder %s38, %s54
    %p56 = scmp.eq.s32.totalorder %s16, 0
    %p57 = por %p55, %p56
    %s59 = sadd.s32 %s58, 1
    %p62 = scmp.eq.s32.totalorder %s10, 1
    %p63 = scmp.ne.s32.totalorder %s58, %s60
    %p64 = scmp.eq.s32.totalorder %s10, 0
    %p65 = por %p63, %p64
    %p66 = scmp.ne.s32.totalorder %s58, %s60
    %p67 = scmp.eq.s32.totalorder %s15, 1
    %p68 = por %p66, %p67
    %p69 = scmp.ne.s32.totalorder %s60, %s61
    %p70 = scmp.eq.s32.totalorder %s15, 0
    %p71 = por %p69, %p70
    %p72 = scmp.ne.s32.totalorder %s60, %s61
    %p73 = scmp.eq.s32.totalorder %s16, 1
    %p74 = por %p72, %p73
    %p76 = scmp.ne.s32.totalorder %s61, %s75
    %p77 = scmp.eq.s32.totalorder %s16, 0
    %p78 = por %p76, %p77
    %s80 = sadd.s32 %s79, 1
    %p83 = scmp.eq.s32.totalorder %s10, 1
    %p84 = scmp.ne.s32.totalorder %s79, %s81
    %p85 = scmp.eq.s32.totalorder %s10, 0
    %p86 = por %p84, %p85
    %p87 = scmp.ne.s32.totalorder %s79, %s81
    %p88 = scmp.eq.s32.totalorder %s15, 1
    %p89 = por %p87, %p88
    %p90 = scmp.ne.s32.totalorder %s81, %s82
    %p91 = scmp.eq.s32.totalorder %s15, 0
    %p92 = por %p90, %p91
    %p93 = scmp.ne.s32.totalorder %s81, %s82
    %p94 = scmp.eq.s32.totalorder %s16, 1
    %p95 = por %p93, %p94
    %p97 = scmp.ne.s32.totalorder %s82, %s96
    %p98 = scmp.eq.s32.totalorder %s16, 0
    %p99 = por %p97, %p98
    %s101 = sadd.s32 %s100, 1
    %p104 = scmp.eq.s32.totalorder %s10, 1
    %p105 = scmp.ne.s32.totalorder %s100, %s102
    %p106 = scmp.eq.s32.totalorder %s10, 0
    %p107 = por %p105, %p106
    %p108 = scmp.ne.s32.totalorder %s100, %s102
    %p109 = scmp.eq.s32.totalorder %s15, 1
    %p110 = por %p108, %p109
    %p111 = scmp.ne.s32.totalorder %s102, %s103
    %p112 = scmp.eq.s32.totalorder %s15, 0
    %p113 = por %p111, %p112
    %p114 = scmp.ne.s32.totalorder %s102, %s103
    %p115 = scmp.eq.s32.totalorder %s16, 1
    %p116 = por %p114, %p115
    %p118 = scmp.ne.s32.totalorder %s103, %s117
    %p119 = scmp.eq.s32.totalorder %s16, 0
    %p120 = por %p118, %p119
    %s121 = ssub.s32 %s17, %s29
    %s122 = ssub.s32 %s18, %s25
    %s123 = sor.u32 %s121, %s122
    %p124 = scmp.eq.s32.totalorder %s123, 0
    %s126 = sadd.s32 %s125, 1
    %s127 = scalar_select %p124, %s125, %s126
    %p130 = pneg %p124
    %p131 = scmp.eq.s32.totalorder %s10, 1
    %p132 = por %p130, %p131
    %p133 = scmp.ne.s32.totalorder %s125, %s128
    %p134 = scmp.eq.s32.totalorder %s10, 0
    %p135 = por %p133, %p134
    %p136 = scmp.ne.s32.totalorder %s125, %s128
    %p137 = scmp.eq.s32.totalorder %s15, 1
    %p138 = por %p136, %p137
    %p139 = scmp.ne.s32.totalorder %s128, %s129
    %p140 = scmp.eq.s32.totalorder %s15, 0
    %p141 = por %p139, %p140
    %p142 = scmp.ne.s32.totalorder %s128, %s129
    %p143 = scmp.eq.s32.totalorder %s16, 1
    %p144 = por %p142, %p143
    %p146 = scmp.ne.s32.totalorder %s129, %s145
    %p147 = scmp.eq.s32.totalorder %s16, 0
    %p148 = por %p146, %p147
    %p149 = scmp.le.s32.totalorder 1, %s10
    %p150 = scmp.lt.s32.totalorder %s10, 3
    %p151 = pnand %p149, %p150
    %p152 = pneg %p151
    // Predicated region
    $region9: #{transition_forward.1} parent=5 // pred_check
      _
    $region10: #{transition_forward.1} parent=5 // pred_check_branch
      %154 = sbr.rel (%p151) target = $region12
    $region11: #{transition_forward.1} parent=5 // pred_region
      %s155 = ssub.s32 %s10, 1
      // Predicated region
      $region13: #{transition_forward.1} parent=11 // pred_check
        %p156 = pneg %p71
      $region14: #{transition_forward.1} parent=11 // pred_check_branch
        %158 = sbr.rel (%p156) target = $region16
      $region15: #{transition_forward.1} parent=11 // pred_region
        _
      $region16: #{transition_forward.1} parent=11 // pred_fallthru
        _
      // Predicated region
      $region17: #{transition_forward.1} parent=11 // pred_check
        %p159 = pneg %p92
      $region18: #{transition_forward.1} parent=11 // pred_check_branch
        %161 = sbr.rel (%p159) target = $region20
      $region19: #{transition_forward.1} parent=11 // pred_region
        _
      $region20: #{transition_forward.1} parent=11 // pred_fallthru
        _
      // Predicated region
      $region21: #{transition_forward.1} parent=11 // pred_check
        %p162 = pneg %p113
      $region22: #{transition_forward.1} parent=11 // pred_check_branch
        %164 = sbr.rel (%p162) target = $region24
      $region23: #{transition_forward.1} parent=11 // pred_region
        _
      $region24: #{transition_forward.1} parent=11 // pred_fallthru
        _
    $region12: #{transition_forward.1} parent=5 // pred_fallthru
      _
    %p165 = scmp.lt.s32.totalorder %s10, 2
    // Predicated region
    $region25: #{transition_forward.1} parent=5 // pred_check
      %p166 = pneg %p165
    $region26: #{transition_forward.1} parent=5 // pred_check_branch
      %168 = sbr.rel (%p166) target = $region28
    $region27: #{transition_forward.1} parent=5 // pred_region
      // Predicated region
      $region29: #{transition_forward.1} parent=27 // pred_check
        %p169 = pneg %p44
      $region30: #{transition_forward.1} parent=27 // pred_check_branch
        %171 = sbr.rel (%p169) target = $region32
      $region31: #{transition_forward.1} parent=27 // pred_region
        %s172 = smul.u32 16, %s18
        %p173 = scmp.lt.s32.totalorder %s17, 1
        %s174 = scalar_select %p173, %s17, 1
        %p175 = scmp.lt.s32.totalorder %s172, 15
        %s176 = scalar_select %p175, %s172, 15
        %s177 = smul.addr %s176, 2
        %s178 = smul.addr %s174, 32
        %s179 = sadd.s32 %s177, %s178
        %s180 = smul.addr %s179, 8
        %s181 = scalar_lea.vmem %s0, %s180
        %s182 = smul.u32 16, %s18
      $region32: #{transition_forward.1} parent=27 // pred_fallthru
        _
    $region28: #{transition_forward.1} parent=5 // pred_fallthru
      _
    %p183 = scmp.le.s32.totalorder 1, %s10
    %p184 = scmp.lt.s32.totalorder %s10, 3
    %p185 = pnand %p183, %p184
    %p186 = pneg %p185
    // Predicated region
    $region33: #{transition_forward.1} parent=5 // pred_check
      _
    $region34: #{transition_forward.1} parent=5 // pred_check_branch
      %188 = sbr.rel (%p185) target = $region36
    $region35: #{transition_forward.1} parent=5 // pred_region
      %s189 = ssub.s32 %s10, 1
      %s190 = smul.u32 16, %s20
      %p191 = scmp.lt.s32.totalorder %s19, 1
      %s192 = scalar_select %p191, %s19, 1
      %p193 = scmp.lt.s32.totalorder %s190, 15
      %s194 = scalar_select %p193, %s190, 15
      %s195 = smul.addr %s194, 2
      %s196 = smul.addr %s192, 32
      %s197 = sadd.s32 %s195, %s196
      %s198 = smul.addr %s197, 8
      %s199 = scalar_lea.vmem %s0, %s198
      %p200 = pneg %p50
      %p201 = pneg %p47
      %p202 = pneg %p71
      %p203 = pneg %p68
      %p204 = pneg %p92
      %p205 = pneg %p89
      %p206 = pneg %p113
      %p207 = pneg %p110
      %p208 = pneg %p141
      %p209 = pneg %p138
      %s210 = smul.u32 8, %s20
      %p211 = scmp.lt.s32.totalorder %s19, 1
      %s212 = scalar_select %p211, %s19, 1
      %p213 = scmp.lt.s32.totalorder %s210, 7
      %s214 = scalar_select %p213, %s210, 7
      %s215 = smul.addr %s212, 8
      %s216 = sadd.s32 %s214, %s215
      %s217 = smul.addr %s216, 8
      %s218 = scalar_lea.vmem %s4, %s217
      %s219 = smul.u32 16, %s20
      %p220 = scmp.lt.s32.totalorder %s19, 1
      %s221 = scalar_select %p220, %s19, 1
      %p222 = scmp.lt.s32.totalorder %s219, 15
      %s223 = scalar_select %p222, %s219, 15
      %s224 = smul.addr %s223, 2
      %s225 = smul.addr %s221, 32
      %s226 = sadd.s32 %s224, %s225
      %s227 = smul.addr %s226, 8
      %s228 = scalar_lea.vmem %s0, %s227
      %s229 = smul.u32 16, %s20
      %s230 = smul.u32 8, %s20
      %p231 = scmp.lt.s32.totalorder %s19, 1
      %s232 = scalar_select %p231, %s19, 1
      %p233 = scmp.lt.s32.totalorder %s230, 7
      %s234 = scalar_select %p233, %s230, 7
      %s235 = smul.addr %s232, 8
      %s236 = sadd.s32 %s234, %s235
      %s237 = smul.addr %s236, 8
      %s238 = scalar_lea.vmem %s4, %s237
      %s239 = smul.u32 8, %s20
      %v241 = vld [vmem:[%s228] sm:$0xff]
      %v242 = vld [vmem:[%s228 + $0x8] sm:$0xff]
      %v243 = vld [vmem:[%s228 + $0x10] sm:$0xff]
      %v244 = vld [vmem:[%s228 + $0x18] sm:$0xff]
      %v245 = vld [vmem:[%s228 + $0x20] sm:$0xff]
      %v246 = vld [vmem:[%s228 + $0x28] sm:$0xff]
      %v247 = vld [vmem:[%s228 + $0x30] sm:$0xff]
      %v248 = vld [vmem:[%s228 + $0x38] sm:$0xff]
      %v249 = vld [vmem:[%s228 + $0x40] sm:$0xff]
      %v250 = vld [vmem:[%s228 + $0x48] sm:$0xff]
      %v251 = vld [vmem:[%s228 + $0x50] sm:$0xff]
      %v252 = vld [vmem:[%s228 + $0x58] sm:$0xff]
      %v253 = vld [vmem:[%s228 + $0x60] sm:$0xff]
      %v254 = vld [vmem:[%s228 + $0x68] sm:$0xff]
      %v255 = vld [vmem:[%s228 + $0x70] sm:$0xff]
      %v256 = vld [vmem:[%s228 + $0x78] sm:$0xff]
      %v257 = vld [vmem:[%s228 + $0x80] sm:$0xff]
      %v258 = vld [vmem:[%s228 + $0x88] sm:$0xff]
      %v259 = vld [vmem:[%s228 + $0x90] sm:$0xff]
      %v260 = vld [vmem:[%s228 + $0x98] sm:$0xff]
      %v261 = vld [vmem:[%s228 + $0xa0] sm:$0xff]
      %v262 = vld [vmem:[%s228 + $0xa8] sm:$0xff]
      %v263 = vld [vmem:[%s228 + $0xb0] sm:$0xff]
      %v264 = vld [vmem:[%s228 + $0xb8] sm:$0xff]
      %v265 = vld [vmem:[%s228 + $0xc0] sm:$0xff]
      %v266 = vld [vmem:[%s228 + $0xc8] sm:$0xff]
      %v267 = vld [vmem:[%s228 + $0xd0] sm:$0xff]
      %v268 = vld [vmem:[%s228 + $0xd8] sm:$0xff]
      %v269 = vld [vmem:[%s228 + $0xe0] sm:$0xff]
      %v270 = vld [vmem:[%s228 + $0xe8] sm:$0xff]
      %v271 = vld [vmem:[%s228 + $0xf0] sm:$0xff]
      %v272 = vld [vmem:[%s228 + $0xf8] sm:$0xff]
      %v273 = vld [vmem:[%s1] sm:$0x1]
      %v275 = vlaneseq
      %v276 = vshrl.u32 %v275, 7
      %v277 = vsub.s32 0, %v276
      %v278 = vrot.slane %v273, %v277
      %v280 = vmul.f32 %v241, %v278
      %v281 = vmul.f32 %v242, %v278
      %v282 = vmul.f32 %v243, %v278
      %v283 = vmul.f32 %v244, %v278
      %v284 = vmul.f32 %v245, %v278
      %v285 = vmul.f32 %v246, %v278
      %v286 = vmul.f32 %v247, %v278
      %v287 = vmul.f32 %v248, %v278
      %v288 = vmul.f32 %v249, %v278
      %v289 = vmul.f32 %v250, %v278
      %v290 = vmul.f32 %v251, %v278
      %v291 = vmul.f32 %v252, %v278
      %v292 = vmul.f32 %v253, %v278
      %v293 = vmul.f32 %v254, %v278
      %v294 = vmul.f32 %v255, %v278
      %v295 = vmul.f32 %v256, %v278
      %v296 = vmul.f32 %v257, %v278
      %v297 = vmul.f32 %v258, %v278
      %v298 = vmul.f32 %v259, %v278
      %v299 = vmul.f32 %v260, %v278
      %v300 = vmul.f32 %v261, %v278
      %v301 = vmul.f32 %v262, %v278
      %v302 = vmul.f32 %v263, %v278
      %v303 = vmul.f32 %v264, %v278
      %v304 = vmul.f32 %v265, %v278
      %v305 = vmul.f32 %v266, %v278
      %v306 = vmul.f32 %v267, %v278
      %v307 = vmul.f32 %v268, %v278
      %v308 = vmul.f32 %v269, %v278
      %v309 = vmul.f32 %v270, %v278
      %v310 = vmul.f32 %v271, %v278
      %v311 = vmul.f32 %v272, %v278
      %v312 = vld [vmem:[%s2] sm:$0x1]
      %v314 = vlaneseq
      %v315 = vshrl.u32 %v314, 7
      %v316 = vsub.s32 0, %v315
      %v317 = vrot.slane %v312, %v316
      %v319 = vadd.f32 %v280, %v317
      %v320 = vadd.f32 %v281, %v317
      %v321 = vadd.f32 %v282, %v317
      %v322 = vadd.f32 %v283, %v317
      %v323 = vadd.f32 %v284, %v317
      %v324 = vadd.f32 %v285, %v317
      %v325 = vadd.f32 %v286, %v317
      %v326 = vadd.f32 %v287, %v317
      %v327 = vadd.f32 %v288, %v317
      %v328 = vadd.f32 %v289, %v317
      %v329 = vadd.f32 %v290, %v317
      %v330 = vadd.f32 %v291, %v317
      %v331 = vadd.f32 %v292, %v317
      %v332 = vadd.f32 %v293, %v317
      %v333 = vadd.f32 %v294, %v317
      %v334 = vadd.f32 %v295, %v317
      %v335 = vadd.f32 %v296, %v317
      %v336 = vadd.f32 %v297, %v317
      %v337 = vadd.f32 %v298, %v317
      %v338 = vadd.f32 %v299, %v317
      %v339 = vadd.f32 %v300, %v317
      %v340 = vadd.f32 %v301, %v317
      %v341 = vadd.f32 %v302, %v317
      %v342 = vadd.f32 %v303, %v317
      %v343 = vadd.f32 %v304, %v317
      %v344 = vadd.f32 %v305, %v317
      %v345 = vadd.f32 %v306, %v317
      %v346 = vadd.f32 %v307, %v317
      %v347 = vadd.f32 %v308, %v317
      %v348 = vadd.f32 %v309, %v317
      %v349 = vadd.f32 %v310, %v317
      %v350 = vadd.f32 %v311, %v317
      %v351 = vmax.f32 %v319, 0.0
      %v352 = vmax.f32 %v320, 0.0
      %v353 = vmax.f32 %v321, 0.0
      %v354 = vmax.f32 %v322, 0.0
      %v355 = vmax.f32 %v323, 0.0
      %v356 = vmax.f32 %v324, 0.0
      %v357 = vmax.f32 %v325, 0.0
      %v358 = vmax.f32 %v326, 0.0
      %v359 = vmax.f32 %v327, 0.0
      %v360 = vmax.f32 %v328, 0.0
      %v361 = vmax.f32 %v329, 0.0
      %v362 = vmax.f32 %v330, 0.0
      %v363 = vmax.f32 %v331, 0.0
      %v364 = vmax.f32 %v332, 0.0
      %v365 = vmax.f32 %v333, 0.0
      %v366 = vmax.f32 %v334, 0.0
      %v367 = vmax.f32 %v335, 0.0
      %v368 = vmax.f32 %v336, 0.0
      %v369 = vmax.f32 %v337, 0.0
      %v370 = vmax.f32 %v338, 0.0
      %v371 = vmax.f32 %v339, 0.0
      %v372 = vmax.f32 %v340, 0.0
      %v373 = vmax.f32 %v341, 0.0
      %v374 = vmax.f32 %v342, 0.0
      %v375 = vmax.f32 %v343, 0.0
      %v376 = vmax.f32 %v344, 0.0
      %v377 = vmax.f32 %v345, 0.0
      %v378 = vmax.f32 %v346, 0.0
      %v379 = vmax.f32 %v347, 0.0
      %v380 = vmax.f32 %v348, 0.0
      %v381 = vmax.f32 %v349, 0.0
      %v382 = vmax.f32 %v350, 0.0
      %v383 = vadd.f32 %v351, %v353
      %v384 = vadd.f32 %v352, %v354
      %v385 = vadd.f32 %v355, %v357
      %v386 = vadd.f32 %v356, %v358
      %v387 = vadd.f32 %v359, %v361
      %v388 = vadd.f32 %v360, %v362
      %v389 = vadd.f32 %v363, %v365
      %v390 = vadd.f32 %v364, %v366
      %v391 = vadd.f32 %v367, %v369
      %v392 = vadd.f32 %v368, %v370
      %v393 = vadd.f32 %v371, %v373
      %v394 = vadd.f32 %v372, %v374
      %v395 = vadd.f32 %v375, %v377
      %v396 = vadd.f32 %v376, %v378
      %v397 = vadd.f32 %v379, %v381
      %v398 = vadd.f32 %v380, %v382
      %v415 = vcombine.high %v383, %v383
      %v417 = vunpack.c.l.s4 1983009808
      %v418 = vunpack.c.0.s8 %v417
      %v419 = vlaneseq
      %v420 = vshrl.u32 %v419, 7
      %v421 = vsub.s32 %v418, %v420
      %v422 = vrot.slane %v383, %v421
      %v424 = vunpack.c.l.s4 1983009808
      %v425 = vunpack.c.0.s8 %v424
      %v426 = vlaneseq
      %v427 = vshrl.u32 %v426, 7
      %v428 = vsub.s32 %v425, %v427
      %v429 = vrot.slane %v415, %v428
      %v430 = vcombine.high %v422, %v422
      %v431 = vcombine.high %v429, %v429
      %v432 = vcombine.high %v384, %v384
      %v434 = vunpack.c.l.s4 1983009808
      %v435 = vunpack.c.0.s8 %v434
      %v436 = vlaneseq
      %v437 = vshrl.u32 %v436, 7
      %v438 = vsub.s32 %v435, %v437
      %v439 = vrot.slane %v384, %v438
      %v441 = vunpack.c.l.s4 1983009808
      %v442 = vunpack.c.0.s8 %v441
      %v443 = vlaneseq
      %v444 = vshrl.u32 %v443, 7
      %v445 = vsub.s32 %v442, %v444
      %v446 = vrot.slane %v432, %v445
      %v447 = vcombine.high %v439, %v439
      %v448 = vcombine.high %v446, %v446
      %v449 = vcombine.high %v385, %v385
      %v451 = vunpack.c.l.s4 1983009808
      %v452 = vunpack.c.0.s8 %v451
      %v453 = vlaneseq
      %v454 = vshrl.u32 %v453, 7
      %v455 = vsub.s32 %v452, %v454
      %v456 = vrot.slane %v385, %v455
      %v458 = vunpack.c.l.s4 1983009808
      %v459 = vunpack.c.0.s8 %v458
      %v460 = vlaneseq
      %v461 = vshrl.u32 %v460, 7
      %v462 = vsub.s32 %v459, %v461
      %v463 = vrot.slane %v449, %v462
      %v464 = vcombine.high %v456, %v456
      %v465 = vcombine.high %v463, %v463
      %v466 = vcombine.high %v386, %v386
      %v468 = vunpack.c.l.s4 1983009808
      %v469 = vunpack.c.0.s8 %v468
      %v470 = vlaneseq
      %v471 = vshrl.u32 %v470, 7
      %v472 = vsub.s32 %v469, %v471
      %v473 = vrot.slane %v386, %v472
      %v475 = vunpack.c.l.s4 1983009808
      %v476 = vunpack.c.0.s8 %v475
      %v477 = vlaneseq
      %v478 = vshrl.u32 %v477, 7
      %v479 = vsub.s32 %v476, %v478
      %v480 = vrot.slane %v466, %v479
      %v481 = vcombine.high %v473, %v473
      %v482 = vcombine.high %v480, %v480
      %v483 = vcombine.high %v387, %v387
      %v485 = vunpack.c.l.s4 1983009808
      %v486 = vunpack.c.0.s8 %v485
      %v487 = vlaneseq
      %v488 = vshrl.u32 %v487, 7
      %v489 = vsub.s32 %v486, %v488
      %v490 = vrot.slane %v387, %v489
      %v492 = vunpack.c.l.s4 1983009808
      %v493 = vunpack.c.0.s8 %v492
      %v494 = vlaneseq
      %v495 = vshrl.u32 %v494, 7
      %v496 = vsub.s32 %v493, %v495
      %v497 = vrot.slane %v483, %v496
      %v498 = vcombine.high %v490, %v490
      %v499 = vcombine.high %v497, %v497
      %v500 = vcombine.high %v388, %v388
      %v502 = vunpack.c.l.s4 1983009808
      %v503 = vunpack.c.0.s8 %v502
      %v504 = vlaneseq
      %v505 = vshrl.u32 %v504, 7
      %v506 = vsub.s32 %v503, %v505
      %v507 = vrot.slane %v388, %v506
      %v509 = vunpack.c.l.s4 1983009808
      %v510 = vunpack.c.0.s8 %v509
      %v511 = vlaneseq
      %v512 = vshrl.u32 %v511, 7
      %v513 = vsub.s32 %v510, %v512
      %v514 = vrot.slane %v500, %v513
      %v515 = vcombine.high %v507, %v507
      %v516 = vcombine.high %v514, %v514
      %v517 = vcombine.high %v389, %v389
      %v519 = vunpack.c.l.s4 1983009808
      %v520 = vunpack.c.0.s8 %v519
      %v521 = vlaneseq
      %v522 = vshrl.u32 %v521, 7
      %v523 = vsub.s32 %v520, %v522
      %v524 = vrot.slane %v389, %v523
      %v526 = vunpack.c.l.s4 1983009808
      %v527 = vunpack.c.0.s8 %v526
      %v528 = vlaneseq
      %v529 = vshrl.u32 %v528, 7
      %v530 = vsub.s32 %v527, %v529
      %v531 = vrot.slane %v517, %v530
      %v532 = vcombine.high %v524, %v524
      %v533 = vcombine.high %v531, %v531
      %v534 = vcombine.high %v390, %v390
      %v536 = vunpack.c.l.s4 1983009808
      %v537 = vunpack.c.0.s8 %v536
      %v538 = vlaneseq
      %v539 = vshrl.u32 %v538, 7
      %v540 = vsub.s32 %v537, %v539
      %v541 = vrot.slane %v390, %v540
      %v543 = vunpack.c.l.s4 1983009808
      %v544 = vunpack.c.0.s8 %v543
      %v545 = vlaneseq
      %v546 = vshrl.u32 %v545, 7
      %v547 = vsub.s32 %v544, %v546
      %v548 = vrot.slane %v534, %v547
      %v549 = vcombine.high %v541, %v541
      %v550 = vcombine.high %v548, %v548
      %v551 = vcombine.high %v391, %v391
      %v553 = vunpack.c.l.s4 1983009808
      %v554 = vunpack.c.0.s8 %v553
      %v555 = vlaneseq
      %v556 = vshrl.u32 %v555, 7
      %v557 = vsub.s32 %v554, %v556
      %v558 = vrot.slane %v391, %v557
      %v560 = vunpack.c.l.s4 1983009808
      %v561 = vunpack.c.0.s8 %v560
      %v562 = vlaneseq
      %v563 = vshrl.u32 %v562, 7
      %v564 = vsub.s32 %v561, %v563
      %v565 = vrot.slane %v551, %v564
      %v566 = vcombine.high %v558, %v558
      %v567 = vcombine.high %v565, %v565
      %v568 = vcombine.high %v392, %v392
      %v570 = vunpack.c.l.s4 1983009808
      %v571 = vunpack.c.0.s8 %v570
      %v572 = vlaneseq
      %v573 = vshrl.u32 %v572, 7
      %v574 = vsub.s32 %v571, %v573
      %v575 = vrot.slane %v392, %v574
      %v577 = vunpack.c.l.s4 1983009808
      %v578 = vunpack.c.0.s8 %v577
      %v579 = vlaneseq
      %v580 = vshrl.u32 %v579, 7
      %v581 = vsub.s32 %v578, %v580
      %v582 = vrot.slane %v568, %v581
      %v583 = vcombine.high %v575, %v575
      %v584 = vcombine.high %v582, %v582
      %v585 = vcombine.high %v393, %v393
      %v587 = vunpack.c.l.s4 1983009808
      %v588 = vunpack.c.0.s8 %v587
      %v589 = vlaneseq
      %v590 = vshrl.u32 %v589, 7
      %v591 = vsub.s32 %v588, %v590
      %v592 = vrot.slane %v393, %v591
      %v594 = vunpack.c.l.s4 1983009808
      %v595 = vunpack.c.0.s8 %v594
      %v596 = vlaneseq
      %v597 = vshrl.u32 %v596, 7
      %v598 = vsub.s32 %v595, %v597
      %v599 = vrot.slane %v585, %v598
      %v600 = vcombine.high %v592, %v592
      %v601 = vcombine.high %v599, %v599
      %v602 = vcombine.high %v394, %v394
      %v604 = vunpack.c.l.s4 1983009808
      %v605 = vunpack.c.0.s8 %v604
      %v606 = vlaneseq
      %v607 = vshrl.u32 %v606, 7
      %v608 = vsub.s32 %v605, %v607
      %v609 = vrot.slane %v394, %v608
      %v611 = vunpack.c.l.s4 1983009808
      %v612 = vunpack.c.0.s8 %v611
      %v613 = vlaneseq
      %v614 = vshrl.u32 %v613, 7
      %v615 = vsub.s32 %v612, %v614
      %v616 = vrot.slane %v602, %v615
      %v617 = vcombine.high %v609, %v609
      %v618 = vcombine.high %v616, %v616
      %v619 = vcombine.high %v395, %v395
      %v621 = vunpack.c.l.s4 1983009808
      %v622 = vunpack.c.0.s8 %v621
      %v623 = vlaneseq
      %v624 = vshrl.u32 %v623, 7
      %v625 = vsub.s32 %v622, %v624
      %v626 = vrot.slane %v395, %v625
      %v628 = vunpack.c.l.s4 1983009808
      %v629 = vunpack.c.0.s8 %v628
      %v630 = vlaneseq
      %v631 = vshrl.u32 %v630, 7
      %v632 = vsub.s32 %v629, %v631
      %v633 = vrot.slane %v619, %v632
      %v634 = vcombine.high %v626, %v626
      %v635 = vcombine.high %v633, %v633
      %v636 = vcombine.high %v396, %v396
      %v638 = vunpack.c.l.s4 1983009808
      %v639 = vunpack.c.0.s8 %v638
      %v640 = vlaneseq
      %v641 = vshrl.u32 %v640, 7
      %v642 = vsub.s32 %v639, %v641
      %v643 = vrot.slane %v396, %v642
      %v645 = vunpack.c.l.s4 1983009808
      %v646 = vunpack.c.0.s8 %v645
      %v647 = vlaneseq
      %v648 = vshrl.u32 %v647, 7
      %v649 = vsub.s32 %v646, %v648
      %v650 = vrot.slane %v636, %v649
      %v651 = vcombine.high %v643, %v643
      %v652 = vcombine.high %v650, %v650
      %v653 = vcombine.high %v397, %v397
      %v655 = vunpack.c.l.s4 1983009808
      %v656 = vunpack.c.0.s8 %v655
      %v657 = vlaneseq
      %v658 = vshrl.u32 %v657, 7
      %v659 = vsub.s32 %v656, %v658
      %v660 = vrot.slane %v397, %v659
      %v662 = vunpack.c.l.s4 1983009808
      %v663 = vunpack.c.0.s8 %v662
      %v664 = vlaneseq
      %v665 = vshrl.u32 %v664, 7
      %v666 = vsub.s32 %v663, %v665
      %v667 = vrot.slane %v653, %v666
      %v668 = vcombine.high %v660, %v660
      %v669 = vcombine.high %v667, %v667
      %v670 = vcombine.high %v398, %v398
      %v672 = vunpack.c.l.s4 1983009808
      %v673 = vunpack.c.0.s8 %v672
      %v674 = vlaneseq
      %v675 = vshrl.u32 %v674, 7
      %v676 = vsub.s32 %v673, %v675
      %v677 = vrot.slane %v398, %v676
      %v679 = vunpack.c.l.s4 1983009808
      %v680 = vunpack.c.0.s8 %v679
      %v681 = vlaneseq
      %v682 = vshrl.u32 %v681, 7
      %v683 = vsub.s32 %v680, %v682
      %v684 = vrot.slane %v670, %v683
      %v685 = vcombine.high %v677, %v677
      %v686 = vcombine.high %v684, %v684
      %vm751 = vcmask 1041408
      %v752 = vsel %vm751, %v422, 0.0
      %v753 = vrot.slane %v752, 4
      %v754 = vadd.f32 %v752, %v753
      %v755 = vrot.slane %v754, 2
      %v756 = vadd.f32 %v754, %v755
      %v757 = vrot.slane %v756, 1
      %v758 = vadd.f32 %v756, %v757
      %v759 = vsel %vm751, %v430, 0.0
      %v760 = vrot.slane %v759, 4
      %v761 = vadd.f32 %v759, %v760
      %v762 = vrot.slane %v761, 2
      %v763 = vadd.f32 %v761, %v762
      %v764 = vrot.slane %v763, 1
      %v765 = vadd.f32 %v763, %v764
      %v766 = vsel %vm751, %v429, 0.0
      %v767 = vrot.slane %v766, 4
      %v768 = vadd.f32 %v766, %v767
      %v769 = vrot.slane %v768, 2
      %v770 = vadd.f32 %v768, %v769
      %v771 = vrot.slane %v770, 1
      %v772 = vadd.f32 %v770, %v771
      %v773 = vsel %vm751, %v431, 0.0
      %v774 = vrot.slane %v773, 4
      %v775 = vadd.f32 %v773, %v774
      %v776 = vrot.slane %v775, 2
      %v777 = vadd.f32 %v775, %v776
      %v778 = vrot.slane %v777, 1
      %v779 = vadd.f32 %v777, %v778
      %v780 = vsel %vm751, %v439, 0.0
      %v781 = vrot.slane %v780, 4
      %v782 = vadd.f32 %v780, %v781
      %v783 = vrot.slane %v782, 2
      %v784 = vadd.f32 %v782, %v783
      %v785 = vrot.slane %v784, 1
      %v786 = vadd.f32 %v784, %v785
      %v787 = vsel %vm751, %v447, 0.0
      %v788 = vrot.slane %v787, 4
      %v789 = vadd.f32 %v787, %v788
      %v790 = vrot.slane %v789, 2
      %v791 = vadd.f32 %v789, %v790
      %v792 = vrot.slane %v791, 1
      %v793 = vadd.f32 %v791, %v792
      %v794 = vsel %vm751, %v446, 0.0
      %v795 = vrot.slane %v794, 4
      %v796 = vadd.f32 %v794, %v795
      %v797 = vrot.slane %v796, 2
      %v798 = vadd.f32 %v796, %v797
      %v799 = vrot.slane %v798, 1
      %v800 = vadd.f32 %v798, %v799
      %v801 = vsel %vm751, %v448, 0.0
      %v802 = vrot.slane %v801, 4
      %v803 = vadd.f32 %v801, %v802
      %v804 = vrot.slane %v803, 2
      %v805 = vadd.f32 %v803, %v804
      %v806 = vrot.slane %v805, 1
      %v807 = vadd.f32 %v805, %v806
      %v808 = vsel %vm751, %v456, 0.0
      %v809 = vrot.slane %v808, 4
      %v810 = vadd.f32 %v808, %v809
      %v811 = vrot.slane %v810, 2
      %v812 = vadd.f32 %v810, %v811
      %v813 = vrot.slane %v812, 1
      %v814 = vadd.f32 %v812, %v813
      %v815 = vsel %vm751, %v464, 0.0
      %v816 = vrot.slane %v815, 4
      %v817 = vadd.f32 %v815, %v816
      %v818 = vrot.slane %v817, 2
      %v819 = vadd.f32 %v817, %v818
      %v820 = vrot.slane %v819, 1
      %v821 = vadd.f32 %v819, %v820
      %v822 = vsel %vm751, %v463, 0.0
      %v823 = vrot.slane %v822, 4
      %v824 = vadd.f32 %v822, %v823
      %v825 = vrot.slane %v824, 2
      %v826 = vadd.f32 %v824, %v825
      %v827 = vrot.slane %v826, 1
      %v828 = vadd.f32 %v826, %v827
      %v829 = vsel %vm751, %v465, 0.0
      %v830 = vrot.slane %v829, 4
      %v831 = vadd.f32 %v829, %v830
      %v832 = vrot.slane %v831, 2
      %v833 = vadd.f32 %v831, %v832
      %v834 = vrot.slane %v833, 1
      %v835 = vadd.f32 %v833, %v834
      %v836 = vsel %vm751, %v473, 0.0
      %v837 = vrot.slane %v836, 4
      %v838 = vadd.f32 %v836, %v837
      %v839 = vrot.slane %v838, 2
      %v840 = vadd.f32 %v838, %v839
      %v841 = vrot.slane %v840, 1
      %v842 = vadd.f32 %v840, %v841
      %v843 = vsel %vm751, %v481, 0.0
      %v844 = vrot.slane %v843, 4
      %v845 = vadd.f32 %v843, %v844
      %v846 = vrot.slane %v845, 2
      %v847 = vadd.f32 %v845, %v846
      %v848 = vrot.slane %v847, 1
      %v849 = vadd.f32 %v847, %v848
      %v850 = vsel %vm751, %v480, 0.0
      %v851 = vrot.slane %v850, 4
      %v852 = vadd.f32 %v850, %v851
      %v853 = vrot.slane %v852, 2
      %v854 = vadd.f32 %v852, %v853
      %v855 = vrot.slane %v854, 1
      %v856 = vadd.f32 %v854, %v855
      %v857 = vsel %vm751, %v482, 0.0
      %v858 = vrot.slane %v857, 4
      %v859 = vadd.f32 %v857, %v858
      %v860 = vrot.slane %v859, 2
      %v861 = vadd.f32 %v859, %v860
      %v862 = vrot.slane %v861, 1
      %v863 = vadd.f32 %v861, %v862
      %v864 = vsel %vm751, %v490, 0.0
      %v865 = vrot.slane %v864, 4
      %v866 = vadd.f32 %v864, %v865
      %v867 = vrot.slane %v866, 2
      %v868 = vadd.f32 %v866, %v867
      %v869 = vrot.slane %v868, 1
      %v870 = vadd.f32 %v868, %v869
      %v871 = vsel %vm751, %v498, 0.0
      %v872 = vrot.slane %v871, 4
      %v873 = vadd.f32 %v871, %v872
      %v874 = vrot.slane %v873, 2
      %v875 = vadd.f32 %v873, %v874
      %v876 = vrot.slane %v875, 1
      %v877 = vadd.f32 %v875, %v876
      %v878 = vsel %vm751, %v497, 0.0
      %v879 = vrot.slane %v878, 4
      %v880 = vadd.f32 %v878, %v879
      %v881 = vrot.slane %v880, 2
      %v882 = vadd.f32 %v880, %v881
      %v883 = vrot.slane %v882, 1
      %v884 = vadd.f32 %v882, %v883
      %v885 = vsel %vm751, %v499, 0.0
      %v886 = vrot.slane %v885, 4
      %v887 = vadd.f32 %v885, %v886
      %v888 = vrot.slane %v887, 2
      %v889 = vadd.f32 %v887, %v888
      %v890 = vrot.slane %v889, 1
      %v891 = vadd.f32 %v889, %v890
      %v892 = vsel %vm751, %v507, 0.0
      %v893 = vrot.slane %v892, 4
      %v894 = vadd.f32 %v892, %v893
      %v895 = vrot.slane %v894, 2
      %v896 = vadd.f32 %v894, %v895
      %v897 = vrot.slane %v896, 1
      %v898 = vadd.f32 %v896, %v897
      %v899 = vsel %vm751, %v515, 0.0
      %v900 = vrot.slane %v899, 4
      %v901 = vadd.f32 %v899, %v900
      %v902 = vrot.slane %v901, 2
      %v903 = vadd.f32 %v901, %v902
      %v904 = vrot.slane %v903, 1
      %v905 = vadd.f32 %v903, %v904
      %v906 = vsel %vm751, %v514, 0.0
      %v907 = vrot.slane %v906, 4
      %v908 = vadd.f32 %v906, %v907
      %v909 = vrot.slane %v908, 2
      %v910 = vadd.f32 %v908, %v909
      %v911 = vrot.slane %v910, 1
      %v912 = vadd.f32 %v910, %v911
      %v913 = vsel %vm751, %v516, 0.0
      %v914 = vrot.slane %v913, 4
      %v915 = vadd.f32 %v913, %v914
      %v916 = vrot.slane %v915, 2
      %v917 = vadd.f32 %v915, %v916
      %v918 = vrot.slane %v917, 1
      %v919 = vadd.f32 %v917, %v918
      %v920 = vsel %vm751, %v524, 0.0
      %v921 = vrot.slane %v920, 4
      %v922 = vadd.f32 %v920, %v921
      %v923 = vrot.slane %v922, 2
      %v924 = vadd.f32 %v922, %v923
      %v925 = vrot.slane %v924, 1
      %v926 = vadd.f32 %v924, %v925
      %v927 = vsel %vm751, %v532, 0.0
      %v928 = vrot.slane %v927, 4
      %v929 = vadd.f32 %v927, %v928
      %v930 = vrot.slane %v929, 2
      %v931 = vadd.f32 %v929, %v930
      %v932 = vrot.slane %v931, 1
      %v933 = vadd.f32 %v931, %v932
      %v934 = vsel %vm751, %v531, 0.0
      %v935 = vrot.slane %v934, 4
      %v936 = vadd.f32 %v934, %v935
      %v937 = vrot.slane %v936, 2
      %v938 = vadd.f32 %v936, %v937
      %v939 = vrot.slane %v938, 1
      %v940 = vadd.f32 %v938, %v939
      %v941 = vsel %vm751, %v533, 0.0
      %v942 = vrot.slane %v941, 4
      %v943 = vadd.f32 %v941, %v942
      %v944 = vrot.slane %v943, 2
      %v945 = vadd.f32 %v943, %v944
      %v946 = vrot.slane %v945, 1
      %v947 = vadd.f32 %v945, %v946
      %v948 = vsel %vm751, %v541, 0.0
      %v949 = vrot.slane %v948, 4
      %v950 = vadd.f32 %v948, %v949
      %v951 = vrot.slane %v950, 2
      %v952 = vadd.f32 %v950, %v951
      %v953 = vrot.slane %v952, 1
      %v954 = vadd.f32 %v952, %v953
      %v955 = vsel %vm751, %v549, 0.0
      %v956 = vrot.slane %v955, 4
      %v957 = vadd.f32 %v955, %v956
      %v958 = vrot.slane %v957, 2
      %v959 = vadd.f32 %v957, %v958
      %v960 = vrot.slane %v959, 1
      %v961 = vadd.f32 %v959, %v960
      %v962 = vsel %vm751, %v548, 0.0
      %v963 = vrot.slane %v962, 4
      %v964 = vadd.f32 %v962, %v963
      %v965 = vrot.slane %v964, 2
      %v966 = vadd.f32 %v964, %v965
      %v967 = vrot.slane %v966, 1
      %v968 = vadd.f32 %v966, %v967
      %v969 = vsel %vm751, %v550, 0.0
      %v970 = vrot.slane %v969, 4
      %v971 = vadd.f32 %v969, %v970
      %v972 = vrot.slane %v971, 2
      %v973 = vadd.f32 %v971, %v972
      %v974 = vrot.slane %v973, 1
      %v975 = vadd.f32 %v973, %v974
      %v976 = vsel %vm751, %v558, 0.0
      %v977 = vrot.slane %v976, 4
      %v978 = vadd.f32 %v976, %v977
      %v979 = vrot.slane %v978, 2
      %v980 = vadd.f32 %v978, %v979
      %v981 = vrot.slane %v980, 1
      %v982 = vadd.f32 %v980, %v981
      %v983 = vsel %vm751, %v566, 0.0
      %v984 = vrot.slane %v983, 4
      %v985 = vadd.f32 %v983, %v984
      %v986 = vrot.slane %v985, 2
      %v987 = vadd.f32 %v985, %v986
      %v988 = vrot.slane %v987, 1
      %v989 = vadd.f32 %v987, %v988
      %v990 = vsel %vm751, %v565, 0.0
      %v991 = vrot.slane %v990, 4
      %v992 = vadd.f32 %v990, %v991
      %v993 = vrot.slane %v992, 2
      %v994 = vadd.f32 %v992, %v993
      %v995 = vrot.slane %v994, 1
      %v996 = vadd.f32 %v994, %v995
      %v997 = vsel %vm751, %v567, 0.0
      %v998 = vrot.slane %v997, 4
      %v999 = vadd.f32 %v997, %v998
      %v1000 = vrot.slane %v999, 2
      %v1001 = vadd.f32 %v999, %v1000
      %v1002 = vrot.slane %v1001, 1
      %v1003 = vadd.f32 %v1001, %v1002
      %v1004 = vsel %vm751, %v575, 0.0
      %v1005 = vrot.slane %v1004, 4
      %v1006 = vadd.f32 %v1004, %v1005
      %v1007 = vrot.slane %v1006, 2
      %v1008 = vadd.f32 %v1006, %v1007
      %v1009 = vrot.slane %v1008, 1
      %v1010 = vadd.f32 %v1008, %v1009
      %v1011 = vsel %vm751, %v583, 0.0
      %v1012 = vrot.slane %v1011, 4
      %v1013 = vadd.f32 %v1011, %v1012
      %v1014 = vrot.slane %v1013, 2
      %v1015 = vadd.f32 %v1013, %v1014
      %v1016 = vrot.slane %v1015, 1
      %v1017 = vadd.f32 %v1015, %v1016
      %v1018 = vsel %vm751, %v582, 0.0
      %v1019 = vrot.slane %v1018, 4
      %v1020 = vadd.f32 %v1018, %v1019
      %v1021 = vrot.slane %v1020, 2
      %v1022 = vadd.f32 %v1020, %v1021
      %v1023 = vrot.slane %v1022, 1
      %v1024 = vadd.f32 %v1022, %v1023
      %v1025 = vsel %vm751, %v584, 0.0
      %v1026 = vrot.slane %v1025, 4
      %v1027 = vadd.f32 %v1025, %v1026
      %v1028 = vrot.slane %v1027, 2
      %v1029 = vadd.f32 %v1027, %v1028
      %v1030 = vrot.slane %v1029, 1
      %v1031 = vadd.f32 %v1029, %v1030
      %v1032 = vsel %vm751, %v592, 0.0
      %v1033 = vrot.slane %v1032, 4
      %v1034 = vadd.f32 %v1032, %v1033
      %v1035 = vrot.slane %v1034, 2
      %v1036 = vadd.f32 %v1034, %v1035
      %v1037 = vrot.slane %v1036, 1
      %v1038 = vadd.f32 %v1036, %v1037
      %v1039 = vsel %vm751, %v600, 0.0
      %v1040 = vrot.slane %v1039, 4
      %v1041 = vadd.f32 %v1039, %v1040
      %v1042 = vrot.slane %v1041, 2
      %v1043 = vadd.f32 %v1041, %v1042
      %v1044 = vrot.slane %v1043, 1
      %v1045 = vadd.f32 %v1043, %v1044
      %v1046 = vsel %vm751, %v599, 0.0
      %v1047 = vrot.slane %v1046, 4
      %v1048 = vadd.f32 %v1046, %v1047
      %v1049 = vrot.slane %v1048, 2
      %v1050 = vadd.f32 %v1048, %v1049
      %v1051 = vrot.slane %v1050, 1
      %v1052 = vadd.f32 %v1050, %v1051
      %v1053 = vsel %vm751, %v601, 0.0
      %v1054 = vrot.slane %v1053, 4
      %v1055 = vadd.f32 %v1053, %v1054
      %v1056 = vrot.slane %v1055, 2
      %v1057 = vadd.f32 %v1055, %v1056
      %v1058 = vrot.slane %v1057, 1
      %v1059 = vadd.f32 %v1057, %v1058
      %v1060 = vsel %vm751, %v609, 0.0
      %v1061 = vrot.slane %v1060, 4
      %v1062 = vadd.f32 %v1060, %v1061
      %v1063 = vrot.slane %v1062, 2
      %v1064 = vadd.f32 %v1062, %v1063
      %v1065 = vrot.slane %v1064, 1
      %v1066 = vadd.f32 %v1064, %v1065
      %v1067 = vsel %vm751, %v617, 0.0
      %v1068 = vrot.slane %v1067, 4
      %v1069 = vadd.f32 %v1067, %v1068
      %v1070 = vrot.slane %v1069, 2
      %v1071 = vadd.f32 %v1069, %v1070
      %v1072 = vrot.slane %v1071, 1
      %v1073 = vadd.f32 %v1071, %v1072
      %v1074 = vsel %vm751, %v616, 0.0
      %v1075 = vrot.slane %v1074, 4
      %v1076 = vadd.f32 %v1074, %v1075
      %v1077 = vrot.slane %v1076, 2
      %v1078 = vadd.f32 %v1076, %v1077
      %v1079 = vrot.slane %v1078, 1
      %v1080 = vadd.f32 %v1078, %v1079
      %v1081 = vsel %vm751, %v618, 0.0
      %v1082 = vrot.slane %v1081, 4
      %v1083 = vadd.f32 %v1081, %v1082
      %v1084 = vrot.slane %v1083, 2
      %v1085 = vadd.f32 %v1083, %v1084
      %v1086 = vrot.slane %v1085, 1
      %v1087 = vadd.f32 %v1085, %v1086
      %v1088 = vsel %vm751, %v626, 0.0
      %v1089 = vrot.slane %v1088, 4
      %v1090 = vadd.f32 %v1088, %v1089
      %v1091 = vrot.slane %v1090, 2
      %v1092 = vadd.f32 %v1090, %v1091
      %v1093 = vrot.slane %v1092, 1
      %v1094 = vadd.f32 %v1092, %v1093
      %v1095 = vsel %vm751, %v634, 0.0
      %v1096 = vrot.slane %v1095, 4
      %v1097 = vadd.f32 %v1095, %v1096
      %v1098 = vrot.slane %v1097, 2
      %v1099 = vadd.f32 %v1097, %v1098
      %v1100 = vrot.slane %v1099, 1
      %v1101 = vadd.f32 %v1099, %v1100
      %v1102 = vsel %vm751, %v633, 0.0
      %v1103 = vrot.slane %v1102, 4
      %v1104 = vadd.f32 %v1102, %v1103
      %v1105 = vrot.slane %v1104, 2
      %v1106 = vadd.f32 %v1104, %v1105
      %v1107 = vrot.slane %v1106, 1
      %v1108 = vadd.f32 %v1106, %v1107
      %v1109 = vsel %vm751, %v635, 0.0
      %v1110 = vrot.slane %v1109, 4
      %v1111 = vadd.f32 %v1109, %v1110
      %v1112 = vrot.slane %v1111, 2
      %v1113 = vadd.f32 %v1111, %v1112
      %v1114 = vrot.slane %v1113, 1
      %v1115 = vadd.f32 %v1113, %v1114
      %v1116 = vsel %vm751, %v643, 0.0
      %v1117 = vrot.slane %v1116, 4
      %v1118 = vadd.f32 %v1116, %v1117
      %v1119 = vrot.slane %v1118, 2
      %v1120 = vadd.f32 %v1118, %v1119
      %v1121 = vrot.slane %v1120, 1
      %v1122 = vadd.f32 %v1120, %v1121
      %v1123 = vsel %vm751, %v651, 0.0
      %v1124 = vrot.slane %v1123, 4
      %v1125 = vadd.f32 %v1123, %v1124
      %v1126 = vrot.slane %v1125, 2
      %v1127 = vadd.f32 %v1125, %v1126
      %v1128 = vrot.slane %v1127, 1
      %v1129 = vadd.f32 %v1127, %v1128
      %v1130 = vsel %vm751, %v650, 0.0
      %v1131 = vrot.slane %v1130, 4
      %v1132 = vadd.f32 %v1130, %v1131
      %v1133 = vrot.slane %v1132, 2
      %v1134 = vadd.f32 %v1132, %v1133
      %v1135 = vrot.slane %v1134, 1
      %v1136 = vadd.f32 %v1134, %v1135
      %v1137 = vsel %vm751, %v652, 0.0
      %v1138 = vrot.slane %v1137, 4
      %v1139 = vadd.f32 %v1137, %v1138
      %v1140 = vrot.slane %v1139, 2
      %v1141 = vadd.f32 %v1139, %v1140
      %v1142 = vrot.slane %v1141, 1
      %v1143 = vadd.f32 %v1141, %v1142
      %v1144 = vsel %vm751, %v660, 0.0
      %v1145 = vrot.slane %v1144, 4
      %v1146 = vadd.f32 %v1144, %v1145
      %v1147 = vrot.slane %v1146, 2
      %v1148 = vadd.f32 %v1146, %v1147
      %v1149 = vrot.slane %v1148, 1
      %v1150 = vadd.f32 %v1148, %v1149
      %v1151 = vsel %vm751, %v668, 0.0
      %v1152 = vrot.slane %v1151, 4
      %v1153 = vadd.f32 %v1151, %v1152
      %v1154 = vrot.slane %v1153, 2
      %v1155 = vadd.f32 %v1153, %v1154
      %v1156 = vrot.slane %v1155, 1
      %v1157 = vadd.f32 %v1155, %v1156
      %v1158 = vsel %vm751, %v667, 0.0
      %v1159 = vrot.slane %v1158, 4
      %v1160 = vadd.f32 %v1158, %v1159
      %v1161 = vrot.slane %v1160, 2
      %v1162 = vadd.f32 %v1160, %v1161
      %v1163 = vrot.slane %v1162, 1
      %v1164 = vadd.f32 %v1162, %v1163
      %v1165 = vsel %vm751, %v669, 0.0
      %v1166 = vrot.slane %v1165, 4
      %v1167 = vadd.f32 %v1165, %v1166
      %v1168 = vrot.slane %v1167, 2
      %v1169 = vadd.f32 %v1167, %v1168
      %v1170 = vrot.slane %v1169, 1
      %v1171 = vadd.f32 %v1169, %v1170
      %v1172 = vsel %vm751, %v677, 0.0
      %v1173 = vrot.slane %v1172, 4
      %v1174 = vadd.f32 %v1172, %v1173
      %v1175 = vrot.slane %v1174, 2
      %v1176 = vadd.f32 %v1174, %v1175
      %v1177 = vrot.slane %v1176, 1
      %v1178 = vadd.f32 %v1176, %v1177
      %v1179 = vsel %vm751, %v685, 0.0
      %v1180 = vrot.slane %v1179, 4
      %v1181 = vadd.f32 %v1179, %v1180
      %v1182 = vrot.slane %v1181, 2
      %v1183 = vadd.f32 %v1181, %v1182
      %v1184 = vrot.slane %v1183, 1
      %v1185 = vadd.f32 %v1183, %v1184
      %v1186 = vsel %vm751, %v684, 0.0
      %v1187 = vrot.slane %v1186, 4
      %v1188 = vadd.f32 %v1186, %v1187
      %v1189 = vrot.slane %v1188, 2
      %v1190 = vadd.f32 %v1188, %v1189
      %v1191 = vrot.slane %v1190, 1
      %v1192 = vadd.f32 %v1190, %v1191
      %v1193 = vsel %vm751, %v686, 0.0
      %v1194 = vrot.slane %v1193, 4
      %v1195 = vadd.f32 %v1193, %v1194
      %v1196 = vrot.slane %v1195, 2
      %v1197 = vadd.f32 %v1195, %v1196
      %v1198 = vrot.slane %v1197, 1
      %v1199 = vadd.f32 %v1197, %v1198
      %v1200 = vmul.f32 %v758, 0.25
      %v1201 = vmul.f32 %v765, 0.25
      %v1202 = vmul.f32 %v772, 0.25
      %v1203 = vmul.f32 %v779, 0.25
      %v1204 = vmul.f32 %v786, 0.25
      %v1205 = vmul.f32 %v793, 0.25
      %v1206 = vmul.f32 %v800, 0.25
      %v1207 = vmul.f32 %v807, 0.25
      %v1208 = vmul.f32 %v814, 0.25
      %v1209 = vmul.f32 %v821, 0.25
      %v1210 = vmul.f32 %v828, 0.25
      %v1211 = vmul.f32 %v835, 0.25
      %v1212 = vmul.f32 %v842, 0.25
      %v1213 = vmul.f32 %v849, 0.25
      %v1214 = vmul.f32 %v856, 0.25
      %v1215 = vmul.f32 %v863, 0.25
      %v1216 = vmul.f32 %v870, 0.25
      %v1217 = vmul.f32 %v877, 0.25
      %v1218 = vmul.f32 %v884, 0.25
      %v1219 = vmul.f32 %v891, 0.25
      %v1220 = vmul.f32 %v898, 0.25
      %v1221 = vmul.f32 %v905, 0.25
      %v1222 = vmul.f32 %v912, 0.25
      %v1223 = vmul.f32 %v919, 0.25
      %v1224 = vmul.f32 %v926, 0.25
      %v1225 = vmul.f32 %v933, 0.25
      %v1226 = vmul.f32 %v940, 0.25
      %v1227 = vmul.f32 %v947, 0.25
      %v1228 = vmul.f32 %v954, 0.25
      %v1229 = vmul.f32 %v961, 0.25
      %v1230 = vmul.f32 %v968, 0.25
      %v1231 = vmul.f32 %v975, 0.25
      %v1232 = vmul.f32 %v982, 0.25
      %v1233 = vmul.f32 %v989, 0.25
      %v1234 = vmul.f32 %v996, 0.25
      %v1235 = vmul.f32 %v1003, 0.25
      %v1236 = vmul.f32 %v1010, 0.25
      %v1237 = vmul.f32 %v1017, 0.25
      %v1238 = vmul.f32 %v1024, 0.25
      %v1239 = vmul.f32 %v1031, 0.25
      %v1240 = vmul.f32 %v1038, 0.25
      %v1241 = vmul.f32 %v1045, 0.25
      %v1242 = vmul.f32 %v1052, 0.25
      %v1243 = vmul.f32 %v1059, 0.25
      %v1244 = vmul.f32 %v1066, 0.25
      %v1245 = vmul.f32 %v1073, 0.25
      %v1246 = vmul.f32 %v1080, 0.25
      %v1247 = vmul.f32 %v1087, 0.25
      %v1248 = vmul.f32 %v1094, 0.25
      %v1249 = vmul.f32 %v1101, 0.25
      %v1250 = vmul.f32 %v1108, 0.25
      %v1251 = vmul.f32 %v1115, 0.25
      %v1252 = vmul.f32 %v1122, 0.25
      %v1253 = vmul.f32 %v1129, 0.25
      %v1254 = vmul.f32 %v1136, 0.25
      %v1255 = vmul.f32 %v1143, 0.25
      %v1256 = vmul.f32 %v1150, 0.25
      %v1257 = vmul.f32 %v1157, 0.25
      %v1258 = vmul.f32 %v1164, 0.25
      %v1259 = vmul.f32 %v1171, 0.25
      %v1260 = vmul.f32 %v1178, 0.25
      %v1261 = vmul.f32 %v1185, 0.25
      %v1262 = vmul.f32 %v1192, 0.25
      %v1263 = vmul.f32 %v1199, 0.25
      %v1264 = vpack.c.bf16 %v1200, %v1200
      %v1265 = vpack.c.bf16 %v1201, %v1201
      %v1266 = vpack.c.bf16 %v1202, %v1202
      %v1267 = vpack.c.bf16 %v1203, %v1203
      %v1268 = vpack.c.bf16 %v1204, %v1204
      %v1269 = vpack.c.bf16 %v1205, %v1205
      %v1270 = vpack.c.bf16 %v1206, %v1206
      %v1271 = vpack.c.bf16 %v1207, %v1207
      %v1272 = vpack.c.bf16 %v1208, %v1208
      %v1273 = vpack.c.bf16 %v1209, %v1209
      %v1274 = vpack.c.bf16 %v1210, %v1210
      %v1275 = vpack.c.bf16 %v1211, %v1211
      %v1276 = vpack.c.bf16 %v1212, %v1212
      %v1277 = vpack.c.bf16 %v1213, %v1213
      %v1278 = vpack.c.bf16 %v1214, %v1214
      %v1279 = vpack.c.bf16 %v1215, %v1215
      %v1280 = vpack.c.bf16 %v1216, %v1216
      %v1281 = vpack.c.bf16 %v1217, %v1217
      %v1282 = vpack.c.bf16 %v1218, %v1218
      %v1283 = vpack.c.bf16 %v1219, %v1219
      %v1284 = vpack.c.bf16 %v1220, %v1220
      %v1285 = vpack.c.bf16 %v1221, %v1221
      %v1286 = vpack.c.bf16 %v1222, %v1222
      %v1287 = vpack.c.bf16 %v1223, %v1223
      %v1288 = vpack.c.bf16 %v1224, %v1224
      %v1289 = vpack.c.bf16 %v1225, %v1225
      %v1290 = vpack.c.bf16 %v1226, %v1226
      %v1291 = vpack.c.bf16 %v1227, %v1227
      %v1292 = vpack.c.bf16 %v1228, %v1228
      %v1293 = vpack.c.bf16 %v1229, %v1229
      %v1294 = vpack.c.bf16 %v1230, %v1230
      %v1295 = vpack.c.bf16 %v1231, %v1231
      %v1296 = vpack.c.bf16 %v1232, %v1232
      %v1297 = vpack.c.bf16 %v1233, %v1233
      %v1298 = vpack.c.bf16 %v1234, %v1234
      %v1299 = vpack.c.bf16 %v1235, %v1235
      %v1300 = vpack.c.bf16 %v1236, %v1236
      %v1301 = vpack.c.bf16 %v1237, %v1237
      %v1302 = vpack.c.bf16 %v1238, %v1238
      %v1303 = vpack.c.bf16 %v1239, %v1239
      %v1304 = vpack.c.bf16 %v1240, %v1240
      %v1305 = vpack.c.bf16 %v1241, %v1241
      %v1306 = vpack.c.bf16 %v1242, %v1242
      %v1307 = vpack.c.bf16 %v1243, %v1243
      %v1308 = vpack.c.bf16 %v1244, %v1244
      %v1309 = vpack.c.bf16 %v1245, %v1245
      %v1310 = vpack.c.bf16 %v1246, %v1246
      %v1311 = vpack.c.bf16 %v1247, %v1247
      %v1312 = vpack.c.bf16 %v1248, %v1248
      %v1313 = vpack.c.bf16 %v1249, %v1249
      %v1314 = vpack.c.bf16 %v1250, %v1250
      %v1315 = vpack.c.bf16 %v1251, %v1251
      %v1316 = vpack.c.bf16 %v1252, %v1252
      %v1317 = vpack.c.bf16 %v1253, %v1253
      %v1318 = vpack.c.bf16 %v1254, %v1254
      %v1319 = vpack.c.bf16 %v1255, %v1255
      %v1320 = vpack.c.bf16 %v1256, %v1256
      %v1321 = vpack.c.bf16 %v1257, %v1257
      %v1322 = vpack.c.bf16 %v1258, %v1258
      %v1323 = vpack.c.bf16 %v1259, %v1259
      %v1324 = vpack.c.bf16 %v1260, %v1260
      %v1325 = vpack.c.bf16 %v1261, %v1261
      %v1326 = vpack.c.bf16 %v1262, %v1262
      %v1327 = vpack.c.bf16 %v1263, %v1263
      %v1328 = vld [vmem:[%s3] sm:$0xf]
      %v1329 = vld [vmem:[%s3 + $0x4] sm:$0xf]
      %v1330 = vld [vmem:[%s3 + $0x8] sm:$0xf]
      %v1331 = vld [vmem:[%s3 + $0xc] sm:$0xf]
      %v1332 = vld [vmem:[%s3 + $0x10] sm:$0xf]
      %v1333 = vld [vmem:[%s3 + $0x14] sm:$0xf]
      %v1334 = vld [vmem:[%s3 + $0x18] sm:$0xf]
      %v1335 = vld [vmem:[%s3 + $0x1c] sm:$0xf]
      %v1336 = vld [vmem:[%s3 + $0x20] sm:$0xf]
      %v1337 = vld [vmem:[%s3 + $0x24] sm:$0xf]
      %v1338 = vld [vmem:[%s3 + $0x28] sm:$0xf]
      %v1339 = vld [vmem:[%s3 + $0x2c] sm:$0xf]
      %v1340 = vld [vmem:[%s3 + $0x30] sm:$0xf]
      %v1341 = vld [vmem:[%s3 + $0x34] sm:$0xf]
      %v1342 = vld [vmem:[%s3 + $0x38] sm:$0xf]
      %v1343 = vld [vmem:[%s3 + $0x3c] sm:$0xf]
      %v1408 = vunpack.c.l.b16 %v1264
      %v1409 = vunpack.c.l.b16 %v1265
      %v1410 = vunpack.c.l.b16 %v1266
      %v1411 = vunpack.c.l.b16 %v1267
      %v1412 = vunpack.c.l.b16 %v1268
      %v1413 = vunpack.c.l.b16 %v1269
      %v1414 = vunpack.c.l.b16 %v1270
      %v1415 = vunpack.c.l.b16 %v1271
      %v1416 = vunpack.c.l.b16 %v1272
      %v1417 = vunpack.c.l.b16 %v1273
      %v1418 = vunpack.c.l.b16 %v1274
      %v1419 = vunpack.c.l.b16 %v1275
      %v1420 = vunpack.c.l.b16 %v1276
      %v1421 = vunpack.c.l.b16 %v1277
      %v1422 = vunpack.c.l.b16 %v1278
      %v1423 = vunpack.c.l.b16 %v1279
      %v1424 = vunpack.c.l.b16 %v1280
      %v1425 = vunpack.c.l.b16 %v1281
      %v1426 = vunpack.c.l.b16 %v1282
      %v1427 = vunpack.c.l.b16 %v1283
      %v1428 = vunpack.c.l.b16 %v1284
      %v1429 = vunpack.c.l.b16 %v1285
      %v1430 = vunpack.c.l.b16 %v1286
      %v1431 = vunpack.c.l.b16 %v1287
      %v1432 = vunpack.c.l.b16 %v1288
      %v1433 = vunpack.c.l.b16 %v1289
      %v1434 = vunpack.c.l.b16 %v1290
      %v1435 = vunpack.c.l.b16 %v1291
      %v1436 = vunpack.c.l.b16 %v1292
      %v1437 = vunpack.c.l.b16 %v1293
      %v1438 = vunpack.c.l.b16 %v1294
      %v1439 = vunpack.c.l.b16 %v1295
      %v1440 = vunpack.c.l.b16 %v1296
      %v1441 = vunpack.c.l.b16 %v1297
      %v1442 = vunpack.c.l.b16 %v1298
      %v1443 = vunpack.c.l.b16 %v1299
      %v1444 = vunpack.c.l.b16 %v1300
      %v1445 = vunpack.c.l.b16 %v1301
      %v1446 = vunpack.c.l.b16 %v1302
      %v1447 = vunpack.c.l.b16 %v1303
      %v1448 = vunpack.c.l.b16 %v1304
      %v1449 = vunpack.c.l.b16 %v1305
      %v1450 = vunpack.c.l.b16 %v1306
      %v1451 = vunpack.c.l.b16 %v1307
      %v1452 = vunpack.c.l.b16 %v1308
      %v1453 = vunpack.c.l.b16 %v1309
      %v1454 = vunpack.c.l.b16 %v1310
      %v1455 = vunpack.c.l.b16 %v1311
      %v1456 = vunpack.c.l.b16 %v1312
      %v1457 = vunpack.c.l.b16 %v1313
      %v1458 = vunpack.c.l.b16 %v1314
      %v1459 = vunpack.c.l.b16 %v1315
      %v1460 = vunpack.c.l.b16 %v1316
      %v1461 = vunpack.c.l.b16 %v1317
      %v1462 = vunpack.c.l.b16 %v1318
      %v1463 = vunpack.c.l.b16 %v1319
      %v1464 = vunpack.c.l.b16 %v1320
      %v1465 = vunpack.c.l.b16 %v1321
      %v1466 = vunpack.c.l.b16 %v1322
      %v1467 = vunpack.c.l.b16 %v1323
      %v1468 = vunpack.c.l.b16 %v1324
      %v1469 = vunpack.c.l.b16 %v1325
      %v1470 = vunpack.c.l.b16 %v1326
      %v1471 = vunpack.c.l.b16 %v1327
      %vm1472 = vcmask 1041409
      %v1473 = vsel %vm1472, %v1409, %v1408
      %vm1474 = vcmask 1042434
      %v1475 = vsel %vm1474, %v1410, %v1473
      %vm1476 = vcmask 1043459
      %v1477 = vsel %vm1476, %v1411, %v1475
      %vm1478 = vcmask 1044484
      %v1479 = vsel %vm1478, %v1412, %v1477
      %vm1480 = vcmask 1045509
      %v1481 = vsel %vm1480, %v1413, %v1479
      %vm1482 = vcmask 1046534
      %v1483 = vsel %vm1482, %v1414, %v1481
      %vm1484 = vcmask 1047559
      %v1485 = vsel %vm1484, %v1415, %v1483
      %v1486 = vsel %vm1472, %v1417, %v1416
      %v1487 = vsel %vm1474, %v1418, %v1486
      %v1488 = vsel %vm1476, %v1419, %v1487
      %v1489 = vsel %vm1478, %v1420, %v1488
      %v1490 = vsel %vm1480, %v1421, %v1489
      %v1491 = vsel %vm1482, %v1422, %v1490
      %v1492 = vsel %vm1484, %v1423, %v1491
      %v1493 = vsel %vm1472, %v1425, %v1424
      %v1494 = vsel %vm1474, %v1426, %v1493
      %v1495 = vsel %vm1476, %v1427, %v1494
      %v1496 = vsel %vm1478, %v1428, %v1495
      %v1497 = vsel %vm1480, %v1429, %v1496
      %v1498 = vsel %vm1482, %v1430, %v1497
      %v1499 = vsel %vm1484, %v1431, %v1498
      %v1500 = vsel %vm1472, %v1433, %v1432
      %v1501 = vsel %vm1474, %v1434, %v1500
      %v1502 = vsel %vm1476, %v1435, %v1501
      %v1503 = vsel %vm1478, %v1436, %v1502
      %v1504 = vsel %vm1480, %v1437, %v1503
      %v1505 = vsel %vm1482, %v1438, %v1504
      %v1506 = vsel %vm1484, %v1439, %v1505
      %v1507 = vsel %vm1472, %v1441, %v1440
      %v1508 = vsel %vm1474, %v1442, %v1507
      %v1509 = vsel %vm1476, %v1443, %v1508
      %v1510 = vsel %vm1478, %v1444, %v1509
      %v1511 = vsel %vm1480, %v1445, %v1510
      %v1512 = vsel %vm1482, %v1446, %v1511
      %v1513 = vsel %vm1484, %v1447, %v1512
      %v1514 = vsel %vm1472, %v1449, %v1448
      %v1515 = vsel %vm1474, %v1450, %v1514
      %v1516 = vsel %vm1476, %v1451, %v1515
      %v1517 = vsel %vm1478, %v1452, %v1516
      %v1518 = vsel %vm1480, %v1453, %v1517
      %v1519 = vsel %vm1482, %v1454, %v1518
      %v1520 = vsel %vm1484, %v1455, %v1519
      %v1521 = vsel %vm1472, %v1457, %v1456
      %v1522 = vsel %vm1474, %v1458, %v1521
      %v1523 = vsel %vm1476, %v1459, %v1522
      %v1524 = vsel %vm1478, %v1460, %v1523
      %v1525 = vsel %vm1480, %v1461, %v1524
      %v1526 = vsel %vm1482, %v1462, %v1525
      %v1527 = vsel %vm1484, %v1463, %v1526
      %v1528 = vsel %vm1472, %v1465, %v1464
      %v1529 = vsel %vm1474, %v1466, %v1528
      %v1530 = vsel %vm1476, %v1467, %v1529
      %v1531 = vsel %vm1478, %v1468, %v1530
      %v1532 = vsel %vm1480, %v1469, %v1531
      %v1533 = vsel %vm1482, %v1470, %v1532
      %v1534 = vsel %vm1484, %v1471, %v1533
      %v1535 = vpack.c.b16 %v1492, %v1485
      %v1536 = vpack.c.b16 %v1506, %v1499
      %v1537 = vpack.c.b16 %v1520, %v1513
      %v1538 = vpack.c.b16 %v1534, %v1527
      %v1559 = vunpack.c.l.b16 %v1328
      %v1560 = vunpack.c.l.b16 %v1329
      %v1561 = vunpack.c.l.b16 %v1330
      %v1562 = vunpack.c.l.b16 %v1331
      %v1563 = vunpack.c.l.b16 %v1332
      %v1564 = vunpack.c.l.b16 %v1333
      %v1565 = vunpack.c.l.b16 %v1334
      %v1566 = vunpack.c.l.b16 %v1335
      %v1567 = vunpack.c.l.b16 %v1336
      %v1568 = vunpack.c.l.b16 %v1337
      %v1569 = vunpack.c.l.b16 %v1338
      %v1570 = vunpack.c.l.b16 %v1339
      %v1571 = vunpack.c.l.b16 %v1340
      %v1572 = vunpack.c.l.b16 %v1341
      %v1573 = vunpack.c.l.b16 %v1342
      %v1574 = vunpack.c.l.b16 %v1343
      %v1575 = vpack.c.b16 %v1560, %v1559
      %v1576 = vpack.c.b16 %v1562, %v1561
      %v1577 = vpack.c.b16 %v1564, %v1563
      %v1578 = vpack.c.b16 %v1566, %v1565
      %v1579 = vpack.c.b16 %v1568, %v1567
      %v1580 = vpack.c.b16 %v1570, %v1569
      %v1581 = vpack.c.b16 %v1572, %v1571
      %v1582 = vpack.c.b16 %v1574, %v1573
      %1591 = vmatprep.subr.bf16.mxu0 0
      %1592 = vmatpush1.bf16.msra.mxu0 %v1575
      %1593 = vmatprep.subr.bf16.mxu0 0
      %1594 = vmatpush1.bf16.msra.mxu0 %v1576
      %1595 = vmatprep.subr.bf16.mxu0 0
      %1596 = vmatpush1.bf16.msra.mxu0 %v1577
      %1597 = vmatprep.subr.bf16.mxu0 0
      %1598 = vmatpush1.bf16.msra.mxu0 %v1578
      %1599 = vmatprep.subr.bf16.mxu0 0
      %1600 = vmatpush1.bf16.msra.mxu0 %v1579
      %1601 = vmatprep.subr.bf16.mxu0 0
      %1602 = vmatpush1.bf16.msra.mxu0 %v1580
      %1603 = vmatprep.subr.bf16.mxu0 0
      %1604 = vmatpush1.bf16.msra.mxu0 %v1581
      %1605 = vmatprep.subr.bf16.mxu0 0
      %1606 = vmatpush1.bf16.msra.mxu0 %v1582
      %1607 = vmatprep.subr.bf16.mxu0 0
      %1608 = vmatpush1.bf16.msra.mxu0 0
      %1609 = vmatprep.subr.bf16.mxu0 0
      %1610 = vmatpush1.bf16.msra.mxu0 0
      %1611 = vmatprep.subr.bf16.mxu0 0
      %1612 = vmatpush1.bf16.msra.mxu0 0
      %1613 = vmatprep.subr.bf16.mxu0 0
      %1614 = vmatpush1.bf16.msra.mxu0 0
      %1615 = vmatprep.subr.bf16.mxu0 0
      %1616 = vmatpush1.bf16.msra.mxu0 0
      %1617 = vmatprep.subr.bf16.mxu0 0
      %1618 = vmatpush1.bf16.msra.mxu0 0
      %1619 = vmatprep.subr.bf16.mxu0 0
      %1620 = vmatpush1.bf16.msra.mxu0 0
      %1621 = vmatprep.subr.bf16.mxu0 0
      %1622 = vmatpush1.bf16.msra.mxu0 0
      %1623 = vmatprep.mubr.bf16.mxu0 0
      %1624 = vmatmul.mubr.bf16.gmra.mrb[0].mxu0 %v1535
      %v1625 = vpop.f32.mrb[0].mxu0
      %v1626 = vadd.f32 0.0, %v1625
      %v1627 = vpop.f32.mrb[0].mxu0
      %v1628 = vpop.f32.mrb[0].mxu0
      %v1629 = vadd.f32 0.0, %v1628
      %v1630 = vpop.f32.mrb[0].mxu0
      %1631 = vmatprep.mubr.bf16.mxu0 0
      %1632 = vmatmul.mubr.bf16.gmra.mrb[0].mxu0 %v1536
      %v1633 = vpop.f32.mrb[0].mxu0
      %v1634 = vadd.f32 0.0, %v1633
      %v1635 = vpop.f32.mrb[0].mxu0
      %v1636 = vpop.f32.mrb[0].mxu0
      %v1637 = vadd.f32 0.0, %v1636
      %v1638 = vpop.f32.mrb[0].mxu0
      %1639 = vmatprep.mubr.bf16.mxu0 0
      %1640 = vmatmul.mubr.bf16.gmra.mrb[0].mxu0 %v1537
      %v1641 = vpop.f32.mrb[0].mxu0
      %v1642 = vadd.f32 0.0, %v1641
      %v1643 = vpop.f32.mrb[0].mxu0
      %v1644 = vpop.f32.mrb[0].mxu0
      %v1645 = vadd.f32 0.0, %v1644
      %v1646 = vpop.f32.mrb[0].mxu0
      %1647 = vmatprep.mubr.bf16.mxu0 0
      %1648 = vmatmul.mubr.bf16.gmra.mrb[0].mxu0 %v1538
      %v1649 = vpop.f32.mrb[0].mxu0
      %v1650 = vadd.f32 0.0, %v1649
      %v1651 = vpop.f32.mrb[0].mxu0
      %v1652 = vpop.f32.mrb[0].mxu0
      %v1653 = vadd.f32 0.0, %v1652
      %v1654 = vpop.f32.mrb[0].mxu0
      %1655 = vdwg.mxu0
      %1656 = vst [vmem:[%s238] sm:$0xff] %v1626
      %1657 = vst [vmem:[%s238 + $0x8] sm:$0xff] %v1629
      %1658 = vst [vmem:[%s238 + $0x10] sm:$0xff] %v1634
      %1659 = vst [vmem:[%s238 + $0x18] sm:$0xff] %v1637
      %1660 = vst [vmem:[%s238 + $0x20] sm:$0xff] %v1642
      %1661 = vst [vmem:[%s238 + $0x28] sm:$0xff] %v1645
      %1662 = vst [vmem:[%s238 + $0x30] sm:$0xff] %v1650
      %1663 = vst [vmem:[%s238 + $0x38] sm:$0xff] %v1653
      %s1664 = smul.u32 8, %s20
      %p1665 = scmp.lt.s32.totalorder %s19, 1
      %s1666 = scalar_select %p1665, %s19, 1
      %p1667 = scmp.lt.s32.totalorder %s1664, 7
      %s1668 = scalar_select %p1667, %s1664, 7
      %s1669 = smul.addr %s1666, 8
      %s1670 = sadd.s32 %s1668, %s1669
      %s1671 = smul.addr %s1670, 8
      %s1672 = scalar_lea.vmem %s4, %s1671
      // Predicated region
      $region37: #{transition_forward.1} parent=35 // pred_check
        %p1673 = pneg %p138
      $region38: #{transition_forward.1} parent=35 // pred_check_branch
        %1675 = sbr.rel (%p1673) target = $region40
      $region39: #{transition_forward.1} parent=35 // pred_region
        %s1676 = smul.u32 8, %s20
      $region40: #{transition_forward.1} parent=35 // pred_fallthru
        _
    $region36: #{transition_forward.1} parent=5 // pred_fallthru
      _
    %p1677 = scmp.le.s32.totalorder 2, %s10
    // Predicated region
    $region41: #{transition_forward.1} parent=5 // pred_check
      %p1678 = pneg %p1677
    $region42: #{transition_forward.1} parent=5 // pred_check_branch
      %1680 = sbr.rel (%p1678) target = $region44
    $region43: #{transition_forward.1} parent=5 // pred_region
      %s1681 = ssub.s32 %s10, 2
      // Predicated region
      $region45: #{transition_forward.1} parent=43 // pred_check
        %p1682 = pneg %p144
      $region46: #{transition_forward.1} parent=43 // pred_check_branch
        %1684 = sbr.rel (%p1682) target = $region48
      $region47: #{transition_forward.1} parent=43 // pred_region
        %s1685 = smul.u32 8, %s22
        %p1686 = scmp.lt.s32.totalorder %s21, 1
        %s1687 = scalar_select %p1686, %s21, 1
        %p1688 = scmp.lt.s32.totalorder %s1685, 7
        %s1689 = scalar_select %p1688, %s1685, 7
        %s1690 = smul.addr %s1687, 8
        %s1691 = sadd.s32 %s1689, %s1690
        %s1692 = smul.addr %s1691, 8
        %s1693 = scalar_lea.vmem %s4, %s1692
      $region48: #{transition_forward.1} parent=43 // pred_fallthru
        _
    $region44: #{transition_forward.1} parent=5 // pred_fallthru
      _
  $region6: #{transition_forward.1} parent=0 // loop_footer
    %s14 = sadd.s32 1, %s10
  $region7: #{transition_forward.1} parent=0 // loop_footer_branch
    %9 = sbr.rel target = $region3
  $region8: #{transition_forward.1} parent=0 // loop_exit
    _

</llo_original>
